<compile_context>
chip_gen: v6e
topology: v6e:2x2x1
jax: 0.10.0
libtpu: 0.0.40
codegen_flags: <defaults>
</compile_context>

<pallas_src>
import functools

import jax
import jax.numpy as jnp
from jax.experimental import pallas as pl
from jax.experimental.pallas import tpu as pltpu

LANES = 128            # vreg lane width
TILE_ROWS_MAX = 4096   # 2 MiB f32 per input tile; 8 MiB total w/ double buffering
TINY_TOTAL = 65536     # below this element count, plain XLA is strictly faster


def _round_down(x: int, m: int) -> int:
    return (x // m) * m


def _round_up(x: int, m: int) -> int:
    return ((x + m - 1) // m) * m


def _sublane_multiple(dtype) -> int:
    # (sublane, lane) tiling: f32 -> (8,128), bf16 -> (16,128), 8-bit -> (32,128)
    return max(8, 32 // jnp.dtype(dtype).itemsize)


def _num_tensorcores() -> int:
    """Best-effort TensorCore count; defaults to 1 (single-TC v5e/v6e)."""
    try:
        info = pltpu.get_tpu_info()
        for attr in ("num_cores", "core_count", "num_tensorcores",
                     "tensorcore_count"):
            v = getattr(info, attr, None)
            if isinstance(v, int) and v > 0:
                return v
    except Exception:
        pass
    try:
        v = getattr(jax.devices()[0], "num_cores", None)
        if isinstance(v, int) and v > 0:
            return v
    except Exception:
        pass
    return 1


def _reduce_rows_to_vreg(sq, tile_rows):
    """(tile_rows, 128) f32 -> (8, 128) partial sums.

    Pure vreg-vs-vreg VPU adds (no cross-lane XLU work).  When possible, use
    4 independent add chains (one per VALU slot) and fold them, so the
    per-tile reduction is not one long serial dependent-add chain.
    """
    if tile_rows % 32 == 0 and tile_rows >= 64:
        q = tile_rows // 4
        parts = [
            sq[i * q:(i + 1) * q].reshape(q // 8, 8, LANES).sum(axis=0)
            for i in range(4)
        ]
        return (parts[0] + parts[1]) + (parts[2] + parts[3])
    return sq.reshape(tile_rows // 8, 8, LANES).sum(axis=0)


def _sse_kernel(p_ref, t_ref, acc_ref, *, rows_valid, tile_rows,
                tiles_per_split, needs_mask):
    split = pl.program_id(0)
    step = pl.program_id(1)

    @pl.when(step == 0)
    def _():
        acc_ref[...] = jnp.zeros_like(acc_ref)

    d = p_ref[...].astype(jnp.float32) - t_ref[...].astype(jnp.float32)

    if not needs_mask:
        # Common case: rows divide evenly into tiles -> no mask anywhere.
        acc_ref[...] += _reduce_rows_to_vreg(d * d, tile_rows)[None]
        return

    # Only the final (partial) tile pays the iota/compare/select cost; all
    # other tiles take the unmasked, memory-bound path.
    row0 = (split * tiles_per_split + step) * tile_rows
    is_full = (row0 + tile_rows) <= rows_valid

    @pl.when(is_full)
    def _():
        acc_ref[...] += _reduce_rows_to_vreg(d * d, tile_rows)[None]

    @pl.when(jnp.logical_not(is_full))
    def _():
        # Rows at/after rows_valid come from a partial-block DMA (unspecified
        # contents) -- zero them BEFORE squaring so NaN/garbage is discarded.
        row_idx = row0 + jax.lax.broadcasted_iota(
            jnp.int32, (tile_rows, LANES), 0)
        dm = jnp.where(row_idx < rows_valid, d, jnp.float32(0.0))
        acc_ref[...] += _reduce_rows_to_vreg(dm * dm, tile_rows)[None]


def hmaps_mse_loss(pred: jax.Array, true: jax.Array) -> jax.Array:
    """Pallas implementation of HMapsMSELoss.forward(pred, true)."""
    assert pred.shape == true.shape, "pred/true shape mismatch"
    batch = pred.shape[0]
    total = int(pred.size)

    # Tiny-input fast path: kernel launch + pipeline overhead dwarfs the work.
    if total <= TINY_TOTAL:
        d = pred.astype(jnp.float32) - true.astype(jnp.float32)
        return (jnp.sum(d * d) / jnp.float32(batch)).astype(jnp.float32)

    p_flat = pred.reshape(-1)
    t_flat = true.reshape(-1)

    sub = max(_sublane_multiple(pred.dtype), _sublane_multiple(true.dtype))
    rows = total // LANES                     # >= 512 past the tiny-path gate
    tile_rows = min(TILE_ROWS_MAX, _round_down(rows, sub))
    n_tiles = pl.cdiv(rows, tile_rows)

    # Leading "parallel" split only when it divides the tile count evenly, so
    # there is never a clamped duplicate-block HBM read.  On single-TC parts
    # (v5e/v6e) this stays 1 and the grid is effectively 1-D.
    cores = _num_tensorcores()
    num_splits = 1
    if cores > 1 and n_tiles >= 2 * cores:
        if n_tiles % cores != 0:
            # Retile slightly so tile count is a multiple of the core count.
            target = _round_up(n_tiles, cores)
            cand = _round_up(pl.cdiv(rows, target), sub)
            if cand > 0 and pl.cdiv(rows, cand) % cores == 0:
                tile_rows = cand
                n_tiles = pl.cdiv(rows, tile_rows)
        if n_tiles % cores == 0:
            num_splits = cores
    tiles_per_split = n_tiles // num_splits

    main = rows * LANES
    # Free layout change when total is a multiple of 128 (the common heatmap
    # case); otherwise a slice of the leading portion (rare, odd shapes).
    p2 = (p_flat if main == total else p_flat[:main]).reshape(rows, LANES)
    t2 = (t_flat if main == total else t_flat[:main]).reshape(rows, LANES)

    needs_mask = (n_tiles * tile_rows) != rows

    kernel = functools.partial(
        _sse_kernel, rows_valid=rows, tile_rows=tile_rows,
        tiles_per_split=tiles_per_split, needs_mask=needs_mask)

    bytes_accessed = (main * jnp.dtype(pred.dtype).itemsize
                      + main * jnp.dtype(true.dtype).itemsize
                      + num_splits * 8 * LANES * 4)
    cost = pl.CostEstimate(flops=3 * main, transcendentals=0,
                           bytes_accessed=bytes_accessed)

    in_index_map = lambda c, i: (c * tiles_per_split + i, 0)  # noqa: E731

    acc = pl.pallas_call(
        kernel,
        out_shape=jax.ShapeDtypeStruct((num_splits, 8, LANES), jnp.float32),
        grid_spec=pltpu.PrefetchScalarGridSpec(
            num_scalar_prefetch=0,
            grid=(num_splits, tiles_per_split),
            in_specs=[
                # Optional sweep: pipeline_mode=pl.Buffered(3) if any DMA-issue
                # gap shows between grid steps (VMEM headroom is ample).
                pl.BlockSpec((tile_rows, LANES), in_index_map),
                pl.BlockSpec((tile_rows, LANES), in_index_map),
            ],
            out_specs=pl.BlockSpec((1, 8, LANES), lambda c, i: (c, 0, 0)),
        ),
        compiler_params=pltpu.CompilerParams(
            dimension_semantics=("parallel", "arbitrary")),
        cost_estimate=cost,
    )(p2, t2)

    # Tiny (num_splits, 8, 128) cross-lane reduce in plain JAX glue.
    sse = jnp.sum(acc)

    if main < total:
        # <128-element flat tail of odd-sized inputs: plain JAX glue.
        dt = p_flat[main:].astype(jnp.float32) - t_flat[main:].astype(jnp.float32)
        sse = sse + jnp.sum(dt * dt)

    # Final divide-by-batch: scalar op, keep in JAX glue.
    return (sse / jnp.float32(batch)).astype(jnp.float32)


if __name__ == "__main__":
    key = jax.random.PRNGKey(0)
    k1, k2, k3, k4 = jax.random.split(key, 4)

    # Typical heatmap shape (17 keypoints, 64x64): exercises the Pallas path.
    pred = jax.random.normal(k1, (2, 17, 64, 64), dtype=jnp.float32)
    true = jax.random.normal(k2, (2, 17, 64, 64), dtype=jnp.float32)
    loss = hmaps_mse_loss(pred, true)
    jax.block_until_ready(loss)
    ref = jnp.sum((pred - true) ** 2) / pred.shape[0]
    assert jnp.allclose(loss, ref, rtol=1e-4, atol=1e-3), (loss, ref)

    # Odd shape: exercises the gated partial-tile mask + <128-element tail.
    p_odd = jax.random.normal(k3, (2, 17, 63, 65), dtype=jnp.float32)
    t_odd = jax.random.normal(k4, (2, 17, 63, 65), dtype=jnp.float32)
    loss_odd = hmaps_mse_loss(p_odd, t_odd)
    jax.block_until_ready(loss_odd)
    ref_odd = jnp.sum((p_odd - t_odd) ** 2) / p_odd.shape[0]
    assert jnp.allclose(loss_odd, ref_odd, rtol=1e-4, atol=1e-3), (loss_odd, ref_odd)

    # bf16 inputs stay bf16 on the HBM stream; cast to f32 inside the kernel.
    p_bf = pred.astype(jnp.bfloat16)
    t_bf = true.astype(jnp.bfloat16)
    loss_bf = hmaps_mse_loss(p_bf, t_bf)
    jax.block_until_ready(loss_bf)
    ref_bf = jnp.sum((p_bf.astype(jnp.float32)
                      - t_bf.astype(jnp.float32)) ** 2) / p_bf.shape[0]
    assert jnp.allclose(loss_bf, ref_bf, rtol=1e-3, atol=1e-2), (loss_bf, ref_bf)

    # Tiny input (the module's minimal case): takes the plain-XLA fast path.
    p_tiny = jax.random.normal(k1, (2, 4, 16, 16), dtype=jnp.float32)
    t_tiny = jax.random.normal(k2, (2, 4, 16, 16), dtype=jnp.float32)
    loss_tiny = hmaps_mse_loss(p_tiny, t_tiny)
    jax.block_until_ready(loss_tiny)
    ref_tiny = jnp.sum((p_tiny - t_tiny) ** 2) / p_tiny.shape[0]
    assert jnp.allclose(loss_tiny, ref_tiny, rtol=1e-5, atol=1e-5), (loss_tiny, ref_tiny)

    print("KERNEL_OK")
</pallas_src>

<mosaic_0001>
module attributes {stable_mosaic.version = 11 : i64} {
  func.func @_sse_kernel(%arg0: i32, %arg1: i32, %arg2: memref<1088x128xf32, #tpu.memory_space<vmem>>, %arg3: memref<1088x128xf32, #tpu.memory_space<vmem>>, %arg4: memref<1x8x128xf32, #tpu.memory_space<vmem>>) attributes {dimension_semantics = [#tpu.dimension_semantics<parallel>, #tpu.dimension_semantics<arbitrary>], iteration_bounds = array<i64: 1, 1>, scalar_prefetch = 0 : i64, scratch_operands = 0 : i64, tpu.core_type = #tpu.core_type<tc>, window_params = [{transform_indices = @transform_0, window_bounds = array<i64: 1088, 128>}, {transform_indices = @transform_1, window_bounds = array<i64: 1088, 128>}, {transform_indices = @transform_2, window_bounds = array<i64: 1, 8, 128>}]} {
    %c0_i32 = arith.constant 0 : i32
    %0 = arith.cmpi eq, %arg1, %c0_i32 : i32
    %1 = arith.extui %0 : i1 to i32
    %c0_i32_0 = arith.constant 0 : i32
    %2 = arith.cmpi ne, %1, %c0_i32_0 : i32
    scf.if %2 {
      %cst_13 = arith.constant 0.000000e+00 : f32
      %26 = vector.broadcast %cst_13 : f32 to vector<1x8x128xf32>
      %c0_14 = arith.constant 0 : index
      %c0_15 = arith.constant 0 : index
      %c0_16 = arith.constant 0 : index
      %27 = vector.load %arg4[%c0_14, %c0_15, %c0_16] : memref<1x8x128xf32, #tpu.memory_space<vmem>>, vector<1x8x128xf32>
      tpu.vector_store %arg4[%c0_14, %c0_15, %c0_16], %26 {strides = array<i32>} : memref<1x8x128xf32, #tpu.memory_space<vmem>>, vector<1x8x128xf32>,
    } else {
    }
    %c0 = arith.constant 0 : index
    %c0_1 = arith.constant 0 : index
    %3 = vector.load %arg2[%c0, %c0_1] : memref<1088x128xf32, #tpu.memory_space<vmem>>, vector<1088x128xf32>
    %c0_2 = arith.constant 0 : index
    %c0_3 = arith.constant 0 : index
    %4 = vector.load %arg3[%c0_2, %c0_3] : memref<1088x128xf32, #tpu.memory_space<vmem>>, vector<1088x128xf32>
    %5 = arith.subf %3, %4 : vector<1088x128xf32>
    %c0_4 = arith.constant 0 : index
    %c0_5 = arith.constant 0 : index
    %c0_6 = arith.constant 0 : index
    %6 = vector.load %arg4[%c0_4, %c0_5, %c0_6] : memref<1x8x128xf32, #tpu.memory_space<vmem>>, vector<1x8x128xf32>
    %7 = arith.mulf %5, %5 : vector<1088x128xf32>
    %8 = vector.extract_strided_slice %7 {offsets = [0, 0], sizes = [272, 128], strides = [1, 1]} : vector<1088x128xf32> to vector<272x128xf32>
    %9 = vector.shape_cast %8 : vector<272x128xf32> to vector<34x8x128xf32>
    %cst = arith.constant dense<0.000000e+00> : vector<8x128xf32>
    %10 = vector.multi_reduction <add>, %9, %cst [0] : vector<34x8x128xf32> to vector<8x128xf32>
    %11 = vector.extract_strided_slice %7 {offsets = [272, 0], sizes = [272, 128], strides = [1, 1]} : vector<1088x128xf32> to vector<272x128xf32>
    %12 = vector.shape_cast %11 : vector<272x128xf32> to vector<34x8x128xf32>
    %cst_7 = arith.constant dense<0.000000e+00> : vector<8x128xf32>
    %13 = vector.multi_reduction <add>, %12, %cst_7 [0] : vector<34x8x128xf32> to vector<8x128xf32>
    %14 = vector.extract_strided_slice %7 {offsets = [544, 0], sizes = [272, 128], strides = [1, 1]} : vector<1088x128xf32> to vector<272x128xf32>
    %15 = vector.shape_cast %14 : vector<272x128xf32> to vector<34x8x128xf32>
    %cst_8 = arith.constant dense<0.000000e+00> : vector<8x128xf32>
    %16 = vector.multi_reduction <add>, %15, %cst_8 [0] : vector<34x8x128xf32> to vector<8x128xf32>
    %17 = vector.extract_strided_slice %7 {offsets = [816, 0], sizes = [272, 128], strides = [1, 1]} : vector<1088x128xf32> to vector<272x128xf32>
    %18 = vector.shape_cast %17 : vector<272x128xf32> to vector<34x8x128xf32>
    %cst_9 = arith.constant dense<0.000000e+00> : vector<8x128xf32>
    %19 = vector.multi_reduction <add>, %18, %cst_9 [0] : vector<34x8x128xf32> to vector<8x128xf32>
    %20 = arith.addf %10, %13 : vector<8x128xf32>
    %21 = arith.addf %16, %19 : vector<8x128xf32>
    %22 = arith.addf %20, %21 : vector<8x128xf32>
    %23 = vector.shape_cast %22 : vector<8x128xf32> to vector<1x8x128xf32>
    %24 = arith.addf %6, %23 : vector<1x8x128xf32>
    %c0_10 = arith.constant 0 : index
    %c0_11 = arith.constant 0 : index
    %c0_12 = arith.constant 0 : index
    %25 = vector.load %arg4[%c0_10, %c0_11, %c0_12] : memref<1x8x128xf32, #tpu.memory_space<vmem>>, vector<1x8x128xf32>
    tpu.vector_store %arg4[%c0_10, %c0_11, %c0_12], %24 {strides = array<i32>} : memref<1x8x128xf32, #tpu.memory_space<vmem>>, vector<1x8x128xf32>,
    return
  }
  func.func @transform_0(%arg0: i32, %arg1: i32) -> (i32, i32) {
    %c1_i32 = arith.constant 1 : i32
    %0 = arith.muli %arg0, %c1_i32 : i32
    %1 = arith.addi %0, %arg1 : i32
    %c0_i32 = arith.constant 0 : i32
    %c0_i32_0 = arith.constant 0 : i32
    return %1, %c0_i32 : i32, i32
  }
  func.func @transform_1(%arg0: i32, %arg1: i32) -> (i32, i32) {
    %c1_i32 = arith.constant 1 : i32
    %0 = arith.muli %arg0, %c1_i32 : i32
    %1 = arith.addi %0, %arg1 : i32
    %c0_i32 = arith.constant 0 : i32
    %c0_i32_0 = arith.constant 0 : i32
    return %1, %c0_i32 : i32, i32
  }
  func.func @transform_2(%arg0: i32, %arg1: i32) -> (i32, i32, i32) {
    %c0_i32 = arith.constant 0 : i32
    %c0_i32_0 = arith.constant 0 : i32
    %c0_i32_1 = arith.constant 0 : i32
    return %arg0, %c0_i32, %c0_i32_0 : i32, i32, i32
  }
}

</mosaic_0001>

<llo_original>
// kernel: tpu_custom_call.1
$region0: #{tpu_custom_call.1}
  #allocation0 [shape = 'u32[]', space=smem, size = 0x4, offset = 0x4, fixed_abs, tag = 'smem constant byte address 0x4 - core index']
  #allocation1 [shape = 'u32[144,128]{1,0:T(1,128)}', space=vmem, size = 0x12000, scoped, tag = 'internal scratch']
  %s0 = inlined_call_operand.hbm [shape: f32[1088,128], index: 0, kind: input, shape index: {}]
  %s1 = inlined_call_operand.hbm [shape: f32[1088,128], index: 1, kind: input, shape index: {}]
  %s2 = inlined_call_operand.hbm [shape: f32[1,8,128], index: 2, kind: output, shape index: {}]
  %s3 = sld [smem:[#allocation0]]
  $region30: #{tpu_custom_call.1} parent=0
    _
  %s5 = ssub.s32 1, %s3
  %s6 = scalar_select 0, %s5, %s3
  $region1: #{tpu_custom_call.1} parent=0
    #allocation2 [shape = 'u8[557056]{0}', space=vmem, size = 0x88000, scoped, tag = 'input window, operand 0, single buffered']
    #allocation3 [shape = 's32[1]{0}', space=sflag, size = 0x4, scoped, tag = 'scoped memory for tpu_custom_call.1']
    #allocation4 [shape = 's32[1]{0}', space=sflag, size = 0x4, scoped, tag = 'scoped memory for tpu_custom_call.1']
    #allocation5 [shape = 'u8[557056]{0}', space=vmem, size = 0x88000, scoped, tag = 'input window, operand 1, single buffered']
    #allocation6 [shape = 's32[1]{0}', space=sflag, size = 0x4, scoped, tag = 'scoped memory for tpu_custom_call.1']
    #allocation7 [shape = 'u8[4096]{0}', space=vmem, size = 0x1000, scoped, tag = 'output window, operand 0, single buffered']
    %7 = vsyncpa [#allocation3], 0
    %8 = vsyncpa [#allocation6], 0
    %9 = vsyncpa [#allocation4], 0
    // Predicated region
    $region2: #{tpu_custom_call.1} parent=1 // pred_check
      _
    $region3: #{tpu_custom_call.1} parent=1 // pred_check_branch
      %11 = sbr.rel (0) target = $region5
    $region4: #{tpu_custom_call.1} parent=1 // pred_region
      %s12 = sadd.s32 0, 0
      %s13 = smul.u32 136, %s12
      %s15 = ssub.s32 17408, 17408
      %16 = vsyncadd [#allocation3], %s15
      %s17 = smul.addr %s13, 128
      %s18 = scalar_lea.hbm %s0, %s17
      %s19 = sshll.u32 [#allocation2], 4
      %s20 = int_to_ptr.vmem [resolvable:$true] %s19
      %25 = dma.hbm_to_vmem [thread:$0]  %s18, 17408, %s20, [#allocation3], 128, 128, 8
    $region5: #{tpu_custom_call.1} parent=1 // pred_fallthru
      _
    // Predicated region
    $region6: #{tpu_custom_call.1} parent=1 // pred_check
      _
    $region7: #{tpu_custom_call.1} parent=1 // pred_check_branch
      %27 = sbr.rel (0) target = $region9
    $region8: #{tpu_custom_call.1} parent=1 // pred_region
      %s28 = sadd.s32 0, 0
      %s29 = smul.u32 136, %s28
      %s31 = ssub.s32 17408, 17408
      %32 = vsyncadd [#allocation6], %s31
      %s33 = smul.addr %s29, 128
      %s34 = scalar_lea.hbm %s1, %s33
      %s35 = sshll.u32 [#allocation5], 4
      %s36 = int_to_ptr.vmem [resolvable:$true] %s35
      %41 = dma.hbm_to_vmem [thread:$0]  %s34, 17408, %s36, [#allocation6], 128, 128, 8
    $region9: #{tpu_custom_call.1} parent=1 // pred_fallthru
      _
    // Predicated region
    $region10: #{tpu_custom_call.1} parent=1 // pred_check
      _
    $region11: #{tpu_custom_call.1} parent=1 // pred_check_branch
      %43 = sbr.rel (0) target = $region13
    $region12: #{tpu_custom_call.1} parent=1 // pred_region
      %44 = dma.done [#allocation3], 17408
    $region13: #{tpu_custom_call.1} parent=1 // pred_fallthru
      _
    // Predicated region
    $region14: #{tpu_custom_call.1} parent=1 // pred_check
      _
    $region15: #{tpu_custom_call.1} parent=1 // pred_check_branch
      %46 = sbr.rel (0) target = $region17
    $region16: #{tpu_custom_call.1} parent=1 // pred_region
      %47 = dma.done [#allocation6], 17408
    $region17: #{tpu_custom_call.1} parent=1 // pred_fallthru
      _
    %s48 = sadd.s32 0, 0
    %s49 = smul.u32 136, %s48
    %s50 = sadd.s32 0, 0
    %s51 = smul.u32 136, %s50
    %p52 = scmp.eq.s32.totalorder 0, 0
    // Predicated region
    $region18: #{tpu_custom_call.1} parent=1 // pred_check
      %p53 = pneg %p52
    $region19: #{tpu_custom_call.1} parent=1 // pred_check_branch
      %55 = sbr.rel (%p53) target = $region21
    $region20: #{tpu_custom_call.1} parent=1 // pred_region
      %56 = vst [vmem:[#allocation7] sm:$0xff] 0.0
    $region21: #{tpu_custom_call.1} parent=1 // pred_fallthru
      _
    %v57 = vld [vmem:[#allocation2] sm:$0xff]
    %v58 = vld [vmem:[#allocation2 + $0x8] sm:$0xff]
    %v59 = vld [vmem:[#allocation2 + $0x10] sm:$0xff]
    %v60 = vld [vmem:[#allocation2 + $0x18] sm:$0xff]
    %v61 = vld [vmem:[#allocation2 + $0x20] sm:$0xff]
    %v62 = vld [vmem:[#allocation2 + $0x28] sm:$0xff]
    %v63 = vld [vmem:[#allocation2 + $0x30] sm:$0xff]
    %v64 = vld [vmem:[#allocation2 + $0x38] sm:$0xff]
    %v65 = vld [vmem:[#allocation2 + $0x40] sm:$0xff]
    %v66 = vld [vmem:[#allocation2 + $0x48] sm:$0xff]
    %v67 = vld [vmem:[#allocation2 + $0x50] sm:$0xff]
    %v68 = vld [vmem:[#allocation2 + $0x58] sm:$0xff]
    %v69 = vld [vmem:[#allocation2 + $0x60] sm:$0xff]
    %v70 = vld [vmem:[#allocation2 + $0x68] sm:$0xff]
    %v71 = vld [vmem:[#allocation2 + $0x70] sm:$0xff]
    %v72 = vld [vmem:[#allocation2 + $0x78] sm:$0xff]
    %v73 = vld [vmem:[#allocation2 + $0x80] sm:$0xff]
    %v74 = vld [vmem:[#allocation2 + $0x88] sm:$0xff]
    %v75 = vld [vmem:[#allocation2 + $0x90] sm:$0xff]
    %v76 = vld [vmem:[#allocation2 + $0x98] sm:$0xff]
    %v77 = vld [vmem:[#allocation2 + $0xa0] sm:$0xff]
    %v78 = vld [vmem:[#allocation2 + $0xa8] sm:$0xff]
    %v79 = vld [vmem:[#allocation2 + $0xb0] sm:$0xff]
    %v80 = vld [vmem:[#allocation2 + $0xb8] sm:$0xff]
    %v81 = vld [vmem:[#allocation2 + $0xc0] sm:$0xff]
    %v82 = vld [vmem:[#allocation2 + $0xc8] sm:$0xff]
    %v83 = vld [vmem:[#allocation2 + $0xd0] sm:$0xff]
    %v84 = vld [vmem:[#allocation2 + $0xd8] sm:$0xff]
    %v85 = vld [vmem:[#allocation2 + $0xe0] sm:$0xff]
    %v86 = vld [vmem:[#allocation2 + $0xe8] sm:$0xff]
    %v87 = vld [vmem:[#allocation2 + $0xf0] sm:$0xff]
    %v88 = vld [vmem:[#allocation2 + $0xf8] sm:$0xff]
    %v89 = vld [vmem:[#allocation2 + $0x100] sm:$0xff]
    %v90 = vld [vmem:[#allocation2 + $0x108] sm:$0xff]
    %v91 = vld [vmem:[#allocation2 + $0x110] sm:$0xff]
    %v92 = vld [vmem:[#allocation2 + $0x118] sm:$0xff]
    %v93 = vld [vmem:[#allocation2 + $0x120] sm:$0xff]
    %v94 = vld [vmem:[#allocation2 + $0x128] sm:$0xff]
    %v95 = vld [vmem:[#allocation2 + $0x130] sm:$0xff]
    %v96 = vld [vmem:[#allocation2 + $0x138] sm:$0xff]
    %v97 = vld [vmem:[#allocation2 + $0x140] sm:$0xff]
    %v98 = vld [vmem:[#allocation2 + $0x148] sm:$0xff]
    %v99 = vld [vmem:[#allocation2 + $0x150] sm:$0xff]
    %v100 = vld [vmem:[#allocation2 + $0x158] sm:$0xff]
    %v101 = vld [vmem:[#allocation2 + $0x160] sm:$0xff]
    %v102 = vld [vmem:[#allocation2 + $0x168] sm:$0xff]
    %v103 = vld [vmem:[#allocation2 + $0x170] sm:$0xff]
    %v104 = vld [vmem:[#allocation2 + $0x178] sm:$0xff]
    %v105 = vld [vmem:[#allocation2 + $0x180] sm:$0xff]
    %v106 = vld [vmem:[#allocation2 + $0x188] sm:$0xff]
    %v107 = vld [vmem:[#allocation2 + $0x190] sm:$0xff]
    %v108 = vld [vmem:[#allocation2 + $0x198] sm:$0xff]
    %v109 = vld [vmem:[#allocation2 + $0x1a0] sm:$0xff]
    %v110 = vld [vmem:[#allocation2 + $0x1a8] sm:$0xff]
    %v111 = vld [vmem:[#allocation2 + $0x1b0] sm:$0xff]
    %v112 = vld [vmem:[#allocation2 + $0x1b8] sm:$0xff]
    %v113 = vld [vmem:[#allocation2 + $0x1c0] sm:$0xff]
    %v114 = vld [vmem:[#allocation2 + $0x1c8] sm:$0xff]
    %v115 = vld [vmem:[#allocation2 + $0x1d0] sm:$0xff]
    %v116 = vld [vmem:[#allocation2 + $0x1d8] sm:$0xff]
    %v117 = vld [vmem:[#allocation2 + $0x1e0] sm:$0xff]
    %v118 = vld [vmem:[#allocation2 + $0x1e8] sm:$0xff]
    %v119 = vld [vmem:[#allocation2 + $0x1f0] sm:$0xff]
    %v120 = vld [vmem:[#allocation2 + $0x1f8] sm:$0xff]
    %v121 = vld [vmem:[#allocation2 + $0x200] sm:$0xff]
    %v122 = vld [vmem:[#allocation2 + $0x208] sm:$0xff]
    %v123 = vld [vmem:[#allocation2 + $0x210] sm:$0xff]
    %v124 = vld [vmem:[#allocation2 + $0x218] sm:$0xff]
    %v125 = vld [vmem:[#allocation2 + $0x220] sm:$0xff]
    %v126 = vld [vmem:[#allocation2 + $0x228] sm:$0xff]
    %v127 = vld [vmem:[#allocation2 + $0x230] sm:$0xff]
    %v128 = vld [vmem:[#allocation2 + $0x238] sm:$0xff]
    %v129 = vld [vmem:[#allocation2 + $0x240] sm:$0xff]
    %v130 = vld [vmem:[#allocation2 + $0x248] sm:$0xff]
    %v131 = vld [vmem:[#allocation2 + $0x250] sm:$0xff]
    %v132 = vld [vmem:[#allocation2 + $0x258] sm:$0xff]
    %v133 = vld [vmem:[#allocation2 + $0x260] sm:$0xff]
    %v134 = vld [vmem:[#allocation2 + $0x268] sm:$0xff]
    %v135 = vld [vmem:[#allocation2 + $0x270] sm:$0xff]
    %v136 = vld [vmem:[#allocation2 + $0x278] sm:$0xff]
    %v137 = vld [vmem:[#allocation2 + $0x280] sm:$0xff]
    %v138 = vld [vmem:[#allocation2 + $0x288] sm:$0xff]
    %v139 = vld [vmem:[#allocation2 + $0x290] sm:$0xff]
    %v140 = vld [vmem:[#allocation2 + $0x298] sm:$0xff]
    %v141 = vld [vmem:[#allocation2 + $0x2a0] sm:$0xff]
    %v142 = vld [vmem:[#allocation2 + $0x2a8] sm:$0xff]
    %v143 = vld [vmem:[#allocation2 + $0x2b0] sm:$0xff]
    %v144 = vld [vmem:[#allocation2 + $0x2b8] sm:$0xff]
    %v145 = vld [vmem:[#allocation2 + $0x2c0] sm:$0xff]
    %v146 = vld [vmem:[#allocation2 + $0x2c8] sm:$0xff]
    %v147 = vld [vmem:[#allocation2 + $0x2d0] sm:$0xff]
    %v148 = vld [vmem:[#allocation2 + $0x2d8] sm:$0xff]
    %v149 = vld [vmem:[#allocation2 + $0x2e0] sm:$0xff]
    %v150 = vld [vmem:[#allocation2 + $0x2e8] sm:$0xff]
    %v151 = vld [vmem:[#allocation2 + $0x2f0] sm:$0xff]
    %v152 = vld [vmem:[#allocation2 + $0x2f8] sm:$0xff]
    %v153 = vld [vmem:[#allocation2 + $0x300] sm:$0xff]
    %v154 = vld [vmem:[#allocation2 + $0x308] sm:$0xff]
    %v155 = vld [vmem:[#allocation2 + $0x310] sm:$0xff]
    %v156 = vld [vmem:[#allocation2 + $0x318] sm:$0xff]
    %v157 = vld [vmem:[#allocation2 + $0x320] sm:$0xff]
    %v158 = vld [vmem:[#allocation2 + $0x328] sm:$0xff]
    %v159 = vld [vmem:[#allocation2 + $0x330] sm:$0xff]
    %v160 = vld [vmem:[#allocation2 + $0x338] sm:$0xff]
    %v161 = vld [vmem:[#allocation2 + $0x340] sm:$0xff]
    %v162 = vld [vmem:[#allocation2 + $0x348] sm:$0xff]
    %v163 = vld [vmem:[#allocation2 + $0x350] sm:$0xff]
    %v164 = vld [vmem:[#allocation2 + $0x358] sm:$0xff]
    %v165 = vld [vmem:[#allocation2 + $0x360] sm:$0xff]
    %v166 = vld [vmem:[#allocation2 + $0x368] sm:$0xff]
    %v167 = vld [vmem:[#allocation2 + $0x370] sm:$0xff]
    %v168 = vld [vmem:[#allocation2 + $0x378] sm:$0xff]
    %v169 = vld [vmem:[#allocation2 + $0x380] sm:$0xff]
    %v170 = vld [vmem:[#allocation2 + $0x388] sm:$0xff]
    %v171 = vld [vmem:[#allocation2 + $0x390] sm:$0xff]
    %v172 = vld [vmem:[#allocation2 + $0x398] sm:$0xff]
    %v173 = vld [vmem:[#allocation2 + $0x3a0] sm:$0xff]
    %v174 = vld [vmem:[#allocation2 + $0x3a8] sm:$0xff]
    %v175 = vld [vmem:[#allocation2 + $0x3b0] sm:$0xff]
    %v176 = vld [vmem:[#allocation2 + $0x3b8] sm:$0xff]
    %v177 = vld [vmem:[#allocation2 + $0x3c0] sm:$0xff]
    %v178 = vld [vmem:[#allocation2 + $0x3c8] sm:$0xff]
    %v179 = vld [vmem:[#allocation2 + $0x3d0] sm:$0xff]
    %v180 = vld [vmem:[#allocation2 + $0x3d8] sm:$0xff]
    %v181 = vld [vmem:[#allocation2 + $0x3e0] sm:$0xff]
    %v182 = vld [vmem:[#allocation2 + $0x3e8] sm:$0xff]
    %v183 = vld [vmem:[#allocation2 + $0x3f0] sm:$0xff]
    %v184 = vld [vmem:[#allocation2 + $0x3f8] sm:$0xff]
    %v185 = vld [vmem:[#allocation2 + $0x400] sm:$0xff]
    %v186 = vld [vmem:[#allocation2 + $0x408] sm:$0xff]
    %v187 = vld [vmem:[#allocation2 + $0x410] sm:$0xff]
    %v188 = vld [vmem:[#allocation2 + $0x418] sm:$0xff]
    %v189 = vld [vmem:[#allocation2 + $0x420] sm:$0xff]
    %v190 = vld [vmem:[#allocation2 + $0x428] sm:$0xff]
    %v191 = vld [vmem:[#allocation2 + $0x430] sm:$0xff]
    %v192 = vld [vmem:[#allocation2 + $0x438] sm:$0xff]
    %v193 = vld [vmem:[#allocation5] sm:$0xff]
    %v194 = vld [vmem:[#allocation5 + $0x8] sm:$0xff]
    %v195 = vld [vmem:[#allocation5 + $0x10] sm:$0xff]
    %v196 = vld [vmem:[#allocation5 + $0x18] sm:$0xff]
    %v197 = vld [vmem:[#allocation5 + $0x20] sm:$0xff]
    %v198 = vld [vmem:[#allocation5 + $0x28] sm:$0xff]
    %v199 = vld [vmem:[#allocation5 + $0x30] sm:$0xff]
    %v200 = vld [vmem:[#allocation5 + $0x38] sm:$0xff]
    %v201 = vld [vmem:[#allocation5 + $0x40] sm:$0xff]
    %v202 = vld [vmem:[#allocation5 + $0x48] sm:$0xff]
    %v203 = vld [vmem:[#allocation5 + $0x50] sm:$0xff]
    %v204 = vld [vmem:[#allocation5 + $0x58] sm:$0xff]
    %v205 = vld [vmem:[#allocation5 + $0x60] sm:$0xff]
    %v206 = vld [vmem:[#allocation5 + $0x68] sm:$0xff]
    %v207 = vld [vmem:[#allocation5 + $0x70] sm:$0xff]
    %v208 = vld [vmem:[#allocation5 + $0x78] sm:$0xff]
    %v209 = vld [vmem:[#allocation5 + $0x80] sm:$0xff]
    %v210 = vld [vmem:[#allocation5 + $0x88] sm:$0xff]
    %v211 = vld [vmem:[#allocation5 + $0x90] sm:$0xff]
    %v212 = vld [vmem:[#allocation5 + $0x98] sm:$0xff]
    %v213 = vld [vmem:[#allocation5 + $0xa0] sm:$0xff]
    %v214 = vld [vmem:[#allocation5 + $0xa8] sm:$0xff]
    %v215 = vld [vmem:[#allocation5 + $0xb0] sm:$0xff]
    %v216 = vld [vmem:[#allocation5 + $0xb8] sm:$0xff]
    %v217 = vld [vmem:[#allocation5 + $0xc0] sm:$0xff]
    %v218 = vld [vmem:[#allocation5 + $0xc8] sm:$0xff]
    %v219 = vld [vmem:[#allocation5 + $0xd0] sm:$0xff]
    %v220 = vld [vmem:[#allocation5 + $0xd8] sm:$0xff]
    %v221 = vld [vmem:[#allocation5 + $0xe0] sm:$0xff]
    %v222 = vld [vmem:[#allocation5 + $0xe8] sm:$0xff]
    %v223 = vld [vmem:[#allocation5 + $0xf0] sm:$0xff]
    %v224 = vld [vmem:[#allocation5 + $0xf8] sm:$0xff]
    %v225 = vld [vmem:[#allocation5 + $0x100] sm:$0xff]
    %v226 = vld [vmem:[#allocation5 + $0x108] sm:$0xff]
    %v227 = vld [vmem:[#allocation5 + $0x110] sm:$0xff]
    %v228 = vld [vmem:[#allocation5 + $0x118] sm:$0xff]
    %v229 = vld [vmem:[#allocation5 + $0x120] sm:$0xff]
    %v230 = vld [vmem:[#allocation5 + $0x128] sm:$0xff]
    %v231 = vld [vmem:[#allocation5 + $0x130] sm:$0xff]
    %v232 = vld [vmem:[#allocation5 + $0x138] sm:$0xff]
    %v233 = vld [vmem:[#allocation5 + $0x140] sm:$0xff]
    %v234 = vld [vmem:[#allocation5 + $0x148] sm:$0xff]
    %v235 = vld [vmem:[#allocation5 + $0x150] sm:$0xff]
    %v236 = vld [vmem:[#allocation5 + $0x158] sm:$0xff]
    %v237 = vld [vmem:[#allocation5 + $0x160] sm:$0xff]
    %v238 = vld [vmem:[#allocation5 + $0x168] sm:$0xff]
    %v239 = vld [vmem:[#allocation5 + $0x170] sm:$0xff]
    %v240 = vld [vmem:[#allocation5 + $0x178] sm:$0xff]
    %v241 = vld [vmem:[#allocation5 + $0x180] sm:$0xff]
    %v242 = vld [vmem:[#allocation5 + $0x188] sm:$0xff]
    %v243 = vld [vmem:[#allocation5 + $0x190] sm:$0xff]
    %v244 = vld [vmem:[#allocation5 + $0x198] sm:$0xff]
    %v245 = vld [vmem:[#allocation5 + $0x1a0] sm:$0xff]
    %v246 = vld [vmem:[#allocation5 + $0x1a8] sm:$0xff]
    %v247 = vld [vmem:[#allocation5 + $0x1b0] sm:$0xff]
    %v248 = vld [vmem:[#allocation5 + $0x1b8] sm:$0xff]
    %v249 = vld [vmem:[#allocation5 + $0x1c0] sm:$0xff]
    %v250 = vld [vmem:[#allocation5 + $0x1c8] sm:$0xff]
    %v251 = vld [vmem:[#allocation5 + $0x1d0] sm:$0xff]
    %v252 = vld [vmem:[#allocation5 + $0x1d8] sm:$0xff]
    %v253 = vld [vmem:[#allocation5 + $0x1e0] sm:$0xff]
    %v254 = vld [vmem:[#allocation5 + $0x1e8] sm:$0xff]
    %v255 = vld [vmem:[#allocation5 + $0x1f0] sm:$0xff]
    %v256 = vld [vmem:[#allocation5 + $0x1f8] sm:$0xff]
    %v257 = vld [vmem:[#allocation5 + $0x200] sm:$0xff]
    %v258 = vld [vmem:[#allocation5 + $0x208] sm:$0xff]
    %v259 = vld [vmem:[#allocation5 + $0x210] sm:$0xff]
    %v260 = vld [vmem:[#allocation5 + $0x218] sm:$0xff]
    %v261 = vld [vmem:[#allocation5 + $0x220] sm:$0xff]
    %v262 = vld [vmem:[#allocation5 + $0x228] sm:$0xff]
    %v263 = vld [vmem:[#allocation5 + $0x230] sm:$0xff]
    %v264 = vld [vmem:[#allocation5 + $0x238] sm:$0xff]
    %v265 = vld [vmem:[#allocation5 + $0x240] sm:$0xff]
    %v266 = vld [vmem:[#allocation5 + $0x248] sm:$0xff]
    %v267 = vld [vmem:[#allocation5 + $0x250] sm:$0xff]
    %v268 = vld [vmem:[#allocation5 + $0x258] sm:$0xff]
    %v269 = vld [vmem:[#allocation5 + $0x260] sm:$0xff]
    %v270 = vld [vmem:[#allocation5 + $0x268] sm:$0xff]
    %v271 = vld [vmem:[#allocation5 + $0x270] sm:$0xff]
    %v272 = vld [vmem:[#allocation5 + $0x278] sm:$0xff]
    %v273 = vld [vmem:[#allocation5 + $0x280] sm:$0xff]
    %v274 = vld [vmem:[#allocation5 + $0x288] sm:$0xff]
    %v275 = vld [vmem:[#allocation5 + $0x290] sm:$0xff]
    %v276 = vld [vmem:[#allocation5 + $0x298] sm:$0xff]
    %v277 = vld [vmem:[#allocation5 + $0x2a0] sm:$0xff]
    %v278 = vld [vmem:[#allocation5 + $0x2a8] sm:$0xff]
    %v279 = vld [vmem:[#allocation5 + $0x2b0] sm:$0xff]
    %v280 = vld [vmem:[#allocation5 + $0x2b8] sm:$0xff]
    %v281 = vld [vmem:[#allocation5 + $0x2c0] sm:$0xff]
    %v282 = vld [vmem:[#allocation5 + $0x2c8] sm:$0xff]
    %v283 = vld [vmem:[#allocation5 + $0x2d0] sm:$0xff]
    %v284 = vld [vmem:[#allocation5 + $0x2d8] sm:$0xff]
    %v285 = vld [vmem:[#allocation5 + $0x2e0] sm:$0xff]
    %v286 = vld [vmem:[#allocation5 + $0x2e8] sm:$0xff]
    %v287 = vld [vmem:[#allocation5 + $0x2f0] sm:$0xff]
    %v288 = vld [vmem:[#allocation5 + $0x2f8] sm:$0xff]
    %v289 = vld [vmem:[#allocation5 + $0x300] sm:$0xff]
    %v290 = vld [vmem:[#allocation5 + $0x308] sm:$0xff]
    %v291 = vld [vmem:[#allocation5 + $0x310] sm:$0xff]
    %v292 = vld [vmem:[#allocation5 + $0x318] sm:$0xff]
    %v293 = vld [vmem:[#allocation5 + $0x320] sm:$0xff]
    %v294 = vld [vmem:[#allocation5 + $0x328] sm:$0xff]
    %v295 = vld [vmem:[#allocation5 + $0x330] sm:$0xff]
    %v296 = vld [vmem:[#allocation5 + $0x338] sm:$0xff]
    %v297 = vld [vmem:[#allocation5 + $0x340] sm:$0xff]
    %v298 = vld [vmem:[#allocation5 + $0x348] sm:$0xff]
    %v299 = vld [vmem:[#allocation5 + $0x350] sm:$0xff]
    %v300 = vld [vmem:[#allocation5 + $0x358] sm:$0xff]
    %v301 = vld [vmem:[#allocation5 + $0x360] sm:$0xff]
    %v302 = vld [vmem:[#allocation5 + $0x368] sm:$0xff]
    %v303 = vld [vmem:[#allocation5 + $0x370] sm:$0xff]
    %v304 = vld [vmem:[#allocation5 + $0x378] sm:$0xff]
    %v305 = vld [vmem:[#allocation5 + $0x380] sm:$0xff]
    %v306 = vld [vmem:[#allocation5 + $0x388] sm:$0xff]
    %v307 = vld [vmem:[#allocation5 + $0x390] sm:$0xff]
    %v308 = vld [vmem:[#allocation5 + $0x398] sm:$0xff]
    %v309 = vld [vmem:[#allocation5 + $0x3a0] sm:$0xff]
    %v310 = vld [vmem:[#allocation5 + $0x3a8] sm:$0xff]
    %v311 = vld [vmem:[#allocation5 + $0x3b0] sm:$0xff]
    %v312 = vld [vmem:[#allocation5 + $0x3b8] sm:$0xff]
    %v313 = vld [vmem:[#allocation5 + $0x3c0] sm:$0xff]
    %v314 = vld [vmem:[#allocation5 + $0x3c8] sm:$0xff]
    %v315 = vld [vmem:[#allocation5 + $0x3d0] sm:$0xff]
    %v316 = vld [vmem:[#allocation5 + $0x3d8] sm:$0xff]
    %v317 = vld [vmem:[#allocation5 + $0x3e0] sm:$0xff]
    %v318 = vld [vmem:[#allocation5 + $0x3e8] sm:$0xff]
    %v319 = vld [vmem:[#allocation5 + $0x3f0] sm:$0xff]
    %v320 = vld [vmem:[#allocation5 + $0x3f8] sm:$0xff]
    %v321 = vld [vmem:[#allocation5 + $0x400] sm:$0xff]
    %v322 = vld [vmem:[#allocation5 + $0x408] sm:$0xff]
    %v323 = vld [vmem:[#allocation5 + $0x410] sm:$0xff]
    %v324 = vld [vmem:[#allocation5 + $0x418] sm:$0xff]
    %v325 = vld [vmem:[#allocation5 + $0x420] sm:$0xff]
    %v326 = vld [vmem:[#allocation5 + $0x428] sm:$0xff]
    %v327 = vld [vmem:[#allocation5 + $0x430] sm:$0xff]
    %v328 = vld [vmem:[#allocation5 + $0x438] sm:$0xff]
    %v329 = vsub.f32 %v57, %v193
    %v330 = vsub.f32 %v58, %v194
    %v331 = vsub.f32 %v59, %v195
    %v332 = vsub.f32 %v60, %v196
    %v333 = vsub.f32 %v61, %v197
    %v334 = vsub.f32 %v62, %v198
    %v335 = vsub.f32 %v63, %v199
    %v336 = vsub.f32 %v64, %v200
    %v337 = vsub.f32 %v65, %v201
    %v338 = vsub.f32 %v66, %v202
    %v339 = vsub.f32 %v67, %v203
    %v340 = vsub.f32 %v68, %v204
    %v341 = vsub.f32 %v69, %v205
    %v342 = vsub.f32 %v70, %v206
    %v343 = vsub.f32 %v71, %v207
    %v344 = vsub.f32 %v72, %v208
    %v345 = vsub.f32 %v73, %v209
    %v346 = vsub.f32 %v74, %v210
    %v347 = vsub.f32 %v75, %v211
    %v348 = vsub.f32 %v76, %v212
    %v349 = vsub.f32 %v77, %v213
    %v350 = vsub.f32 %v78, %v214
    %v351 = vsub.f32 %v79, %v215
    %v352 = vsub.f32 %v80, %v216
    %v353 = vsub.f32 %v81, %v217
    %v354 = vsub.f32 %v82, %v218
    %v355 = vsub.f32 %v83, %v219
    %v356 = vsub.f32 %v84, %v220
    %v357 = vsub.f32 %v85, %v221
    %v358 = vsub.f32 %v86, %v222
    %v359 = vsub.f32 %v87, %v223
    %v360 = vsub.f32 %v88, %v224
    %v361 = vsub.f32 %v89, %v225
    %v362 = vsub.f32 %v90, %v226
    %v363 = vsub.f32 %v91, %v227
    %v364 = vsub.f32 %v92, %v228
    %v365 = vsub.f32 %v93, %v229
    %v366 = vsub.f32 %v94, %v230
    %v367 = vsub.f32 %v95, %v231
    %v368 = vsub.f32 %v96, %v232
    %v369 = vsub.f32 %v97, %v233
    %v370 = vsub.f32 %v98, %v234
    %v371 = vsub.f32 %v99, %v235
    %v372 = vsub.f32 %v100, %v236
    %v373 = vsub.f32 %v101, %v237
    %v374 = vsub.f32 %v102, %v238
    %v375 = vsub.f32 %v103, %v239
    %v376 = vsub.f32 %v104, %v240
    %v377 = vsub.f32 %v105, %v241
    %v378 = vsub.f32 %v106, %v242
    %v379 = vsub.f32 %v107, %v243
    %v380 = vsub.f32 %v108, %v244
    %v381 = vsub.f32 %v109, %v245
    %v382 = vsub.f32 %v110, %v246
    %v383 = vsub.f32 %v111, %v247
    %v384 = vsub.f32 %v112, %v248
    %v385 = vsub.f32 %v113, %v249
    %v386 = vsub.f32 %v114, %v250
    %v387 = vsub.f32 %v115, %v251
    %v388 = vsub.f32 %v116, %v252
    %v389 = vsub.f32 %v117, %v253
    %v390 = vsub.f32 %v118, %v254
    %v391 = vsub.f32 %v119, %v255
    %v392 = vsub.f32 %v120, %v256
    %v393 = vsub.f32 %v121, %v257
    %v394 = vsub.f32 %v122, %v258
    %v395 = vsub.f32 %v123, %v259
    %v396 = vsub.f32 %v124, %v260
    %v397 = vsub.f32 %v125, %v261
    %v398 = vsub.f32 %v126, %v262
    %v399 = vsub.f32 %v127, %v263
    %v400 = vsub.f32 %v128, %v264
    %v401 = vsub.f32 %v129, %v265
    %v402 = vsub.f32 %v130, %v266
    %v403 = vsub.f32 %v131, %v267
    %v404 = vsub.f32 %v132, %v268
    %v405 = vsub.f32 %v133, %v269
    %v406 = vsub.f32 %v134, %v270
    %v407 = vsub.f32 %v135, %v271
    %v408 = vsub.f32 %v136, %v272
    %v409 = vsub.f32 %v137, %v273
    %v410 = vsub.f32 %v138, %v274
    %v411 = vsub.f32 %v139, %v275
    %v412 = vsub.f32 %v140, %v276
    %v413 = vsub.f32 %v141, %v277
    %v414 = vsub.f32 %v142, %v278
    %v415 = vsub.f32 %v143, %v279
    %v416 = vsub.f32 %v144, %v280
    %v417 = vsub.f32 %v145, %v281
    %v418 = vsub.f32 %v146, %v282
    %v419 = vsub.f32 %v147, %v283
    %v420 = vsub.f32 %v148, %v284
    %v421 = vsub.f32 %v149, %v285
    %v422 = vsub.f32 %v150, %v286
    %v423 = vsub.f32 %v151, %v287
    %v424 = vsub.f32 %v152, %v288
    %v425 = vsub.f32 %v153, %v289
    %v426 = vsub.f32 %v154, %v290
    %v427 = vsub.f32 %v155, %v291
    %v428 = vsub.f32 %v156, %v292
    %v429 = vsub.f32 %v157, %v293
    %v430 = vsub.f32 %v158, %v294
    %v431 = vsub.f32 %v159, %v295
    %v432 = vsub.f32 %v160, %v296
    %v433 = vsub.f32 %v161, %v297
    %v434 = vsub.f32 %v162, %v298
    %v435 = vsub.f32 %v163, %v299
    %v436 = vsub.f32 %v164, %v300
    %v437 = vsub.f32 %v165, %v301
    %v438 = vsub.f32 %v166, %v302
    %v439 = vsub.f32 %v167, %v303
    %v440 = vsub.f32 %v168, %v304
    %v441 = vsub.f32 %v169, %v305
    %v442 = vsub.f32 %v170, %v306
    %v443 = vsub.f32 %v171, %v307
    %v444 = vsub.f32 %v172, %v308
    %v445 = vsub.f32 %v173, %v309
    %v446 = vsub.f32 %v174, %v310
    %v447 = vsub.f32 %v175, %v311
    %v448 = vsub.f32 %v176, %v312
    %v449 = vsub.f32 %v177, %v313
    %v450 = vsub.f32 %v178, %v314
    %v451 = vsub.f32 %v179, %v315
    %v452 = vsub.f32 %v180, %v316
    %v453 = vsub.f32 %v181, %v317
    %v454 = vsub.f32 %v182, %v318
    %v455 = vsub.f32 %v183, %v319
    %v456 = vsub.f32 %v184, %v320
    %v457 = vsub.f32 %v185, %v321
    %v458 = vsub.f32 %v186, %v322
    %v459 = vsub.f32 %v187, %v323
    %v460 = vsub.f32 %v188, %v324
    %v461 = vsub.f32 %v189, %v325
    %v462 = vsub.f32 %v190, %v326
    %v463 = vsub.f32 %v191, %v327
    %v464 = vsub.f32 %v192, %v328
    %v465 = vld [vmem:[#allocation7] sm:$0xff]
    %v466 = vmul.f32 %v329, %v329
    %v467 = vmul.f32 %v330, %v330
    %v468 = vmul.f32 %v331, %v331
    %v469 = vmul.f32 %v332, %v332
    %v470 = vmul.f32 %v333, %v333
    %v471 = vmul.f32 %v334, %v334
    %v472 = vmul.f32 %v335, %v335
    %v473 = vmul.f32 %v336, %v336
    %v474 = vmul.f32 %v337, %v337
    %v475 = vmul.f32 %v338, %v338
    %v476 = vmul.f32 %v339, %v339
    %v477 = vmul.f32 %v340, %v340
    %v478 = vmul.f32 %v341, %v341
    %v479 = vmul.f32 %v342, %v342
    %v480 = vmul.f32 %v343, %v343
    %v481 = vmul.f32 %v344, %v344
    %v482 = vmul.f32 %v345, %v345
    %v483 = vmul.f32 %v346, %v346
    %v484 = vmul.f32 %v347, %v347
    %v485 = vmul.f32 %v348, %v348
    %v486 = vmul.f32 %v349, %v349
    %v487 = vmul.f32 %v350, %v350
    %v488 = vmul.f32 %v351, %v351
    %v489 = vmul.f32 %v352, %v352
    %v490 = vmul.f32 %v353, %v353
    %v491 = vmul.f32 %v354, %v354
    %v492 = vmul.f32 %v355, %v355
    %v493 = vmul.f32 %v356, %v356
    %v494 = vmul.f32 %v357, %v357
    %v495 = vmul.f32 %v358, %v358
    %v496 = vmul.f32 %v359, %v359
    %v497 = vmul.f32 %v360, %v360
    %v498 = vmul.f32 %v361, %v361
    %v499 = vmul.f32 %v362, %v362
    %v500 = vmul.f32 %v363, %v363
    %v501 = vmul.f32 %v364, %v364
    %v502 = vmul.f32 %v365, %v365
    %v503 = vmul.f32 %v366, %v366
    %v504 = vmul.f32 %v367, %v367
    %v505 = vmul.f32 %v368, %v368
    %v506 = vmul.f32 %v369, %v369
    %v507 = vmul.f32 %v370, %v370
    %v508 = vmul.f32 %v371, %v371
    %v509 = vmul.f32 %v372, %v372
    %v510 = vmul.f32 %v373, %v373
    %v511 = vmul.f32 %v374, %v374
    %v512 = vmul.f32 %v375, %v375
    %v513 = vmul.f32 %v376, %v376
    %v514 = vmul.f32 %v377, %v377
    %v515 = vmul.f32 %v378, %v378
    %v516 = vmul.f32 %v379, %v379
    %v517 = vmul.f32 %v380, %v380
    %v518 = vmul.f32 %v381, %v381
    %v519 = vmul.f32 %v382, %v382
    %v520 = vmul.f32 %v383, %v383
    %v521 = vmul.f32 %v384, %v384
    %v522 = vmul.f32 %v385, %v385
    %v523 = vmul.f32 %v386, %v386
    %v524 = vmul.f32 %v387, %v387
    %v525 = vmul.f32 %v388, %v388
    %v526 = vmul.f32 %v389, %v389
    %v527 = vmul.f32 %v390, %v390
    %v528 = vmul.f32 %v391, %v391
    %v529 = vmul.f32 %v392, %v392
    %v530 = vmul.f32 %v393, %v393
    %v531 = vmul.f32 %v394, %v394
    %v532 = vmul.f32 %v395, %v395
    %v533 = vmul.f32 %v396, %v396
    %v534 = vmul.f32 %v397, %v397
    %v535 = vmul.f32 %v398, %v398
    %v536 = vmul.f32 %v399, %v399
    %v537 = vmul.f32 %v400, %v400
    %v538 = vmul.f32 %v401, %v401
    %v539 = vmul.f32 %v402, %v402
    %v540 = vmul.f32 %v403, %v403
    %v541 = vmul.f32 %v404, %v404
    %v542 = vmul.f32 %v405, %v405
    %v543 = vmul.f32 %v406, %v406
    %v544 = vmul.f32 %v407, %v407
    %v545 = vmul.f32 %v408, %v408
    %v546 = vmul.f32 %v409, %v409
    %v547 = vmul.f32 %v410, %v410
    %v548 = vmul.f32 %v411, %v411
    %v549 = vmul.f32 %v412, %v412
    %v550 = vmul.f32 %v413, %v413
    %v551 = vmul.f32 %v414, %v414
    %v552 = vmul.f32 %v415, %v415
    %v553 = vmul.f32 %v416, %v416
    %v554 = vmul.f32 %v417, %v417
    %v555 = vmul.f32 %v418, %v418
    %v556 = vmul.f32 %v419, %v419
    %v557 = vmul.f32 %v420, %v420
    %v558 = vmul.f32 %v421, %v421
    %v559 = vmul.f32 %v422, %v422
    %v560 = vmul.f32 %v423, %v423
    %v561 = vmul.f32 %v424, %v424
    %v562 = vmul.f32 %v425, %v425
    %v563 = vmul.f32 %v426, %v426
    %v564 = vmul.f32 %v427, %v427
    %v565 = vmul.f32 %v428, %v428
    %v566 = vmul.f32 %v429, %v429
    %v567 = vmul.f32 %v430, %v430
    %v568 = vmul.f32 %v431, %v431
    %v569 = vmul.f32 %v432, %v432
    %v570 = vmul.f32 %v433, %v433
    %v571 = vmul.f32 %v434, %v434
    %v572 = vmul.f32 %v435, %v435
    %v573 = vmul.f32 %v436, %v436
    %v574 = vmul.f32 %v437, %v437
    %v575 = vmul.f32 %v438, %v438
    %v576 = vmul.f32 %v439, %v439
    %v577 = vmul.f32 %v440, %v440
    %v578 = vmul.f32 %v441, %v441
    %v579 = vmul.f32 %v442, %v442
    %v580 = vmul.f32 %v443, %v443
    %v581 = vmul.f32 %v444, %v444
    %v582 = vmul.f32 %v445, %v445
    %v583 = vmul.f32 %v446, %v446
    %v584 = vmul.f32 %v447, %v447
    %v585 = vmul.f32 %v448, %v448
    %v586 = vmul.f32 %v449, %v449
    %v587 = vmul.f32 %v450, %v450
    %v588 = vmul.f32 %v451, %v451
    %v589 = vmul.f32 %v452, %v452
    %v590 = vmul.f32 %v453, %v453
    %v591 = vmul.f32 %v454, %v454
    %v592 = vmul.f32 %v455, %v455
    %v593 = vmul.f32 %v456, %v456
    %v594 = vmul.f32 %v457, %v457
    %v595 = vmul.f32 %v458, %v458
    %v596 = vmul.f32 %v459, %v459
    %v597 = vmul.f32 %v460, %v460
    %v598 = vmul.f32 %v461, %v461
    %v599 = vmul.f32 %v462, %v462
    %v600 = vmul.f32 %v463, %v463
    %v601 = vmul.f32 %v464, %v464
    %v602 = vadd.f32 %v466, %v467
    %v603 = vadd.f32 %v602, %v468
    %v604 = vadd.f32 %v603, %v469
    %v605 = vadd.f32 %v604, %v470
    %v606 = vadd.f32 %v605, %v471
    %v607 = vadd.f32 %v606, %v472
    %v608 = vadd.f32 %v607, %v473
    %v609 = vadd.f32 %v608, %v474
    %v610 = vadd.f32 %v609, %v475
    %v611 = vadd.f32 %v610, %v476
    %v612 = vadd.f32 %v611, %v477
    %v613 = vadd.f32 %v612, %v478
    %v614 = vadd.f32 %v613, %v479
    %v615 = vadd.f32 %v614, %v480
    %v616 = vadd.f32 %v615, %v481
    %v617 = vadd.f32 %v616, %v482
    %v618 = vadd.f32 %v617, %v483
    %v619 = vadd.f32 %v618, %v484
    %v620 = vadd.f32 %v619, %v485
    %v621 = vadd.f32 %v620, %v486
    %v622 = vadd.f32 %v621, %v487
    %v623 = vadd.f32 %v622, %v488
    %v624 = vadd.f32 %v623, %v489
    %v625 = vadd.f32 %v624, %v490
    %v626 = vadd.f32 %v625, %v491
    %v627 = vadd.f32 %v626, %v492
    %v628 = vadd.f32 %v627, %v493
    %v629 = vadd.f32 %v628, %v494
    %v630 = vadd.f32 %v629, %v495
    %v631 = vadd.f32 %v630, %v496
    %v632 = vadd.f32 %v631, %v497
    %v633 = vadd.f32 %v632, %v498
    %v634 = vadd.f32 %v633, %v499
    %v635 = vadd.f32 %v500, %v501
    %v636 = vadd.f32 %v635, %v502
    %v637 = vadd.f32 %v636, %v503
    %v638 = vadd.f32 %v637, %v504
    %v639 = vadd.f32 %v638, %v505
    %v640 = vadd.f32 %v639, %v506
    %v641 = vadd.f32 %v640, %v507
    %v642 = vadd.f32 %v641, %v508
    %v643 = vadd.f32 %v642, %v509
    %v644 = vadd.f32 %v643, %v510
    %v645 = vadd.f32 %v644, %v511
    %v646 = vadd.f32 %v645, %v512
    %v647 = vadd.f32 %v646, %v513
    %v648 = vadd.f32 %v647, %v514
    %v649 = vadd.f32 %v648, %v515
    %v650 = vadd.f32 %v649, %v516
    %v651 = vadd.f32 %v650, %v517
    %v652 = vadd.f32 %v651, %v518
    %v653 = vadd.f32 %v652, %v519
    %v654 = vadd.f32 %v653, %v520
    %v655 = vadd.f32 %v654, %v521
    %v656 = vadd.f32 %v655, %v522
    %v657 = vadd.f32 %v656, %v523
    %v658 = vadd.f32 %v657, %v524
    %v659 = vadd.f32 %v658, %v525
    %v660 = vadd.f32 %v659, %v526
    %v661 = vadd.f32 %v660, %v527
    %v662 = vadd.f32 %v661, %v528
    %v663 = vadd.f32 %v662, %v529
    %v664 = vadd.f32 %v663, %v530
    %v665 = vadd.f32 %v664, %v531
    %v666 = vadd.f32 %v665, %v532
    %v667 = vadd.f32 %v666, %v533
    %v668 = vadd.f32 %v534, %v535
    %v669 = vadd.f32 %v668, %v536
    %v670 = vadd.f32 %v669, %v537
    %v671 = vadd.f32 %v670, %v538
    %v672 = vadd.f32 %v671, %v539
    %v673 = vadd.f32 %v672, %v540
    %v674 = vadd.f32 %v673, %v541
    %v675 = vadd.f32 %v674, %v542
    %v676 = vadd.f32 %v675, %v543
    %v677 = vadd.f32 %v676, %v544
    %v678 = vadd.f32 %v677, %v545
    %v679 = vadd.f32 %v678, %v546
    %v680 = vadd.f32 %v679, %v547
    %v681 = vadd.f32 %v680, %v548
    %v682 = vadd.f32 %v681, %v549
    %v683 = vadd.f32 %v682, %v550
    %v684 = vadd.f32 %v683, %v551
    %v685 = vadd.f32 %v684, %v552
    %v686 = vadd.f32 %v685, %v553
    %v687 = vadd.f32 %v686, %v554
    %v688 = vadd.f32 %v687, %v555
    %v689 = vadd.f32 %v688, %v556
    %v690 = vadd.f32 %v689, %v557
    %v691 = vadd.f32 %v690, %v558
    %v692 = vadd.f32 %v691, %v559
    %v693 = vadd.f32 %v692, %v560
    %v694 = vadd.f32 %v693, %v561
    %v695 = vadd.f32 %v694, %v562
    %v696 = vadd.f32 %v695, %v563
    %v697 = vadd.f32 %v696, %v564
    %v698 = vadd.f32 %v697, %v565
    %v699 = vadd.f32 %v698, %v566
    %v700 = vadd.f32 %v699, %v567
    %v701 = vadd.f32 %v568, %v569
    %v702 = vadd.f32 %v701, %v570
    %v703 = vadd.f32 %v702, %v571
    %v704 = vadd.f32 %v703, %v572
    %v705 = vadd.f32 %v704, %v573
    %v706 = vadd.f32 %v705, %v574
    %v707 = vadd.f32 %v706, %v575
    %v708 = vadd.f32 %v707, %v576
    %v709 = vadd.f32 %v708, %v577
    %v710 = vadd.f32 %v709, %v578
    %v711 = vadd.f32 %v710, %v579
    %v712 = vadd.f32 %v711, %v580
    %v713 = vadd.f32 %v712, %v581
    %v714 = vadd.f32 %v713, %v582
    %v715 = vadd.f32 %v714, %v583
    %v716 = vadd.f32 %v715, %v584
    %v717 = vadd.f32 %v716, %v585
    %v718 = vadd.f32 %v717, %v586
    %v719 = vadd.f32 %v718, %v587
    %v720 = vadd.f32 %v719, %v588
    %v721 = vadd.f32 %v720, %v589
    %v722 = vadd.f32 %v721, %v590
    %v723 = vadd.f32 %v722, %v591
    %v724 = vadd.f32 %v723, %v592
    %v725 = vadd.f32 %v724, %v593
    %v726 = vadd.f32 %v725, %v594
    %v727 = vadd.f32 %v726, %v595
    %v728 = vadd.f32 %v727, %v596
    %v729 = vadd.f32 %v728, %v597
    %v730 = vadd.f32 %v729, %v598
    %v731 = vadd.f32 %v730, %v599
    %v732 = vadd.f32 %v731, %v600
    %v733 = vadd.f32 %v732, %v601
    %v734 = vadd.f32 %v634, %v667
    %v735 = vadd.f32 %v700, %v733
    %v736 = vadd.f32 %v734, %v735
    %v737 = vadd.f32 %v465, %v736
    %738 = vst [vmem:[#allocation7] sm:$0xff] %v737
    // Predicated region
    $region22: #{tpu_custom_call.1} parent=1 // pred_check
      _
    $region23: #{tpu_custom_call.1} parent=1 // pred_check_branch
      %740 = sbr.rel (0) target = $region25
    $region24: #{tpu_custom_call.1} parent=1 // pred_region
      %s742 = ssub.s32 128, 128
      %743 = vsyncadd [#allocation4], %s742
      %s745 = sshll.u32 [#allocation7], 4
      %s746 = int_to_ptr.vmem [resolvable:$true] %s745
      %748 = dma.vmem_to_hbm [thread:$0]  %s746, 128, %s2, [#allocation4]
    $region25: #{tpu_custom_call.1} parent=1 // pred_fallthru
      _
    // Predicated region
    $region26: #{tpu_custom_call.1} parent=1 // pred_check
      _
    $region27: #{tpu_custom_call.1} parent=1 // pred_check_branch
      %750 = sbr.rel (0) target = $region29
    $region28: #{tpu_custom_call.1} parent=1 // pred_region
      %751 = dma.done [#allocation4], 128
    $region29: #{tpu_custom_call.1} parent=1 // pred_fallthru
      _
    %752 = vsyncpa [#allocation3], 1
    %753 = vsyncpa [#allocation6], 1
    %754 = vsyncpa [#allocation4], 1

</llo_original>
